<compile_context>
chip_gen: v6e
topology: v6e:2x2x1
jax: 0.10.0
libtpu: 0.0.40
codegen_flags: <defaults>
</compile_context>

<pallas_src>
import jax
import jax.numpy as jnp
from jax import lax
from jax.experimental import pallas as pl
from jax.experimental.pallas import tpu as pltpu


def _deepstream_kernel(preds_ref, scores_ref, classes_ref):
    preds = preds_ref[...]                      # (TN, C) float32
    tn, n_cls = preds.shape

    # Row-wise max over the class (lane) axis; keepdims for the compare below.
    scores = jnp.max(preds, axis=-1, keepdims=True)             # (TN, 1)

    # argmax with first-occurrence semantics (matches torch.max): smallest
    # class index among the maxima.
    idx = lax.broadcasted_iota(jnp.int32, (tn, n_cls), 1)       # (TN, C)
    first_idx = jnp.min(jnp.where(preds == scores, idx, n_cls),
                        axis=-1, keepdims=True)                 # (TN, 1) int32
    # Clamp so an all-NaN row still yields an in-range class id.
    first_idx = jnp.minimum(first_idx, n_cls - 1)

    # Lane-dense stores: (TN, 1) column -> (1, TN) row (XLU relayout; the XLU
    # slot is idle in this kernel so this is effectively free).
    scores_ref[...] = jnp.transpose(scores, (1, 0))
    classes_ref[...] = jnp.transpose(first_idx, (1, 0)).astype(classes_ref.dtype)


def _pick_tile_n(n, target=2048, min_steps=4):
    """Anchor-tile size: a multiple of 128, <= target, aiming for >= min_steps
    grid steps along N (v7x megacore sharding + pipeline ramp), otherwise as
    large as possible (HBM-bound kernel -> bigger blocks amortize per-step
    overhead)."""
    if n <= 128:
        return n                                   # single full-extent block
    cap = max(128, (pl.cdiv(n, min_steps) // 128) * 128)
    return max(128, min(target, cap))


def deepstream_output(x, tile_n=2048):
    """x = (boxes [B,N,4] f32, preds [B,N,C] f32) -> (boxes, scores, classes)."""
    boxes, preds = x
    B, N, C = preds.shape
    tn = _pick_tile_n(N, tile_n)
    grid = (B, pl.cdiv(N, tn))      # cdiv: works for any N; tail block clipped

    scores_slab, classes_slab = pl.pallas_call(
        _deepstream_kernel,
        out_shape=(
            jax.ShapeDtypeStruct((B, 1, N), preds.dtype),   # scores, lane-dense
            jax.ShapeDtypeStruct((B, 1, N), jnp.float32),   # classes, lane-dense
        ),
        grid_spec=pltpu.PrefetchScalarGridSpec(
            num_scalar_prefetch=0,
            grid=grid,
            in_specs=[
                # Class axis kept full (un-tiled) so OOB tail rows can never
                # leak padding into the per-row max/argmax.
                pl.BlockSpec((pl.Squeezed(), tn, C), lambda b, j: (b, j, 0)),
            ],
            out_specs=[
                pl.BlockSpec((pl.Squeezed(), 1, tn), lambda b, j: (b, 0, j)),
                pl.BlockSpec((pl.Squeezed(), 1, tn), lambda b, j: (b, 0, j)),
            ],
        ),
        compiler_params=pltpu.CompilerParams(
            dimension_semantics=("parallel", "parallel"),
        ),
        cost_estimate=pl.CostEstimate(
            flops=3 * B * N * C,
            transcendentals=0,
            bytes_accessed=B * N * C * 4 + 2 * B * N * 4,
        ),
    )(preds)

    # (B, 1, N) -> (B, N, 1) is a pure metadata reshape (same row-major order).
    scores = scores_slab.reshape(B, N, 1)
    classes = classes_slab.reshape(B, N, 1)

    # boxes is an identity pass-through: no kernel traffic at all.
    return boxes, scores, classes


def _check_case(key, B, N, C, tile_n=2048):
    kb, kp = jax.random.split(key)
    boxes = jax.random.uniform(kb, (B, N, 4), dtype=jnp.float32)
    preds = jax.random.uniform(kp, (B, N, C), dtype=jnp.float32)

    out_boxes, out_scores, out_classes = deepstream_output((boxes, preds), tile_n)
    jax.block_until_ready((out_boxes, out_scores, out_classes))

    ref_scores = jnp.max(preds, axis=2, keepdims=True)
    ref_classes = jnp.argmax(preds, axis=2, keepdims=True).astype(jnp.float32)

    assert out_boxes.shape == (B, N, 4)
    assert out_scores.shape == (B, N, 1)
    assert out_classes.shape == (B, N, 1) and out_classes.dtype == jnp.float32
    assert jnp.array_equal(out_boxes, boxes)
    assert jnp.allclose(out_scores, ref_scores)
    assert jnp.array_equal(out_classes, ref_classes)


if __name__ == "__main__":
    key = jax.random.PRNGKey(0)
    k1, k2, k3 = jax.random.split(key, 3)

    # Small demo shapes consistent with the module (boxes [B,N,4], preds [B,N,C]).
    # Case A: aligned N, multi-step grid on both axes (tn=128 -> grid (2, 2)).
    _check_case(k1, B=2, N=256, C=8)
    # Case B: N not a multiple of 128 -> exercises the cdiv grid + clipped
    # tail block (tn=128 -> grid (1, 3), last block 44 valid rows).
    _check_case(k2, B=1, N=300, C=8)
    # Case C: larger anchor count -> exercises a bigger tile (tn=512, grid (1, 4)).
    _check_case(k3, B=1, N=2048, C=8)

    print("KERNEL_OK")
</pallas_src>

<mosaic_0001>
module attributes {stable_mosaic.version = 11 : i64} {
  func.func @_deepstream_kernel(%arg0: i32, %arg1: i32, %arg2: memref<1x128x8xf32, #tpu.memory_space<vmem>>, %arg3: memref<1x1x128xf32, #tpu.memory_space<vmem>>, %arg4: memref<1x1x128xf32, #tpu.memory_space<vmem>>) attributes {dimension_semantics = [#tpu.dimension_semantics<parallel>, #tpu.dimension_semantics<parallel>], iteration_bounds = array<i64: 2, 2>, scalar_prefetch = 0 : i64, scratch_operands = 0 : i64, tpu.core_type = #tpu.core_type<tc>, window_params = [{transform_indices = @transform_0, window_bounds = array<i64: 1, 128, 8>}, {transform_indices = @transform_1, window_bounds = array<i64: 1, 1, 128>}, {transform_indices = @transform_2, window_bounds = array<i64: 1, 1, 128>}]} {
    %c0 = arith.constant 0 : index
    %c0_0 = arith.constant 0 : index
    %c0_1 = arith.constant 0 : index
    %0 = vector.load %arg2[%c0, %c0_0, %c0_1] : memref<1x128x8xf32, #tpu.memory_space<vmem>>, vector<1x128x8xf32>
    %1 = vector.shape_cast %0 : vector<1x128x8xf32> to vector<128x8xf32>
    %cst = arith.constant dense<0xFF800000> : vector<128xf32>
    %2 = vector.multi_reduction <maximumf>, %1, %cst [1] : vector<128x8xf32> to vector<128xf32>
    %3 = vector.shape_cast %2 : vector<128xf32> to vector<128x1xf32>
    %4 = tpu.iota {dimensions = array<i32: 1>} : vector<128x8xi32>
    %5 = vector.broadcast %3 : vector<128x1xf32> to vector<128x8xf32>
    %6 = arith.cmpf oeq, %1, %5 : vector<128x8xf32>
    %c8_i32 = arith.constant 8 : i32
    %7 = vector.broadcast %c8_i32 : i32 to vector<128x8xi32>
    %8 = arith.select %6, %4, %7 : vector<128x8xi1>, vector<128x8xi32>
    %cst_2 = arith.constant dense<2147483647> : vector<128xi32>
    %9 = vector.multi_reduction <minsi>, %8, %cst_2 [1] : vector<128x8xi32> to vector<128xi32>
    %10 = vector.shape_cast %9 : vector<128xi32> to vector<128x1xi32>
    %c7_i32 = arith.constant 7 : i32
    %11 = vector.broadcast %c7_i32 : i32 to vector<128x1xi32>
    %12 = arith.minsi %10, %11 : vector<128x1xi32>
    %13 = tpu.transpose %3, [1, 0] : vector<128x1xf32> -> vector<1x128xf32>
    %c0_3 = arith.constant 0 : index
    %c0_4 = arith.constant 0 : index
    %c0_5 = arith.constant 0 : index
    %14 = vector.load %arg3[%c0_3, %c0_4, %c0_5] : memref<1x1x128xf32, #tpu.memory_space<vmem>>, vector<1x1x128xf32>
    %15 = vector.shape_cast %14 : vector<1x1x128xf32> to vector<1x128xf32>
    %16 = vector.shape_cast %13 : vector<1x128xf32> to vector<1x1x128xf32>
    tpu.vector_store %arg3[%c0_3, %c0_4, %c0_5], %16 {strides = array<i32>} : memref<1x1x128xf32, #tpu.memory_space<vmem>>, vector<1x1x128xf32>,
    %17 = tpu.transpose %12, [1, 0] : vector<128x1xi32> -> vector<1x128xi32>
    %18 = arith.sitofp %17 : vector<1x128xi32> to vector<1x128xf32>
    %c0_6 = arith.constant 0 : index
    %c0_7 = arith.constant 0 : index
    %c0_8 = arith.constant 0 : index
    %19 = vector.load %arg4[%c0_6, %c0_7, %c0_8] : memref<1x1x128xf32, #tpu.memory_space<vmem>>, vector<1x1x128xf32>
    %20 = vector.shape_cast %19 : vector<1x1x128xf32> to vector<1x128xf32>
    %21 = vector.shape_cast %18 : vector<1x128xf32> to vector<1x1x128xf32>
    tpu.vector_store %arg4[%c0_6, %c0_7, %c0_8], %21 {strides = array<i32>} : memref<1x1x128xf32, #tpu.memory_space<vmem>>, vector<1x1x128xf32>,
    return
  }
  func.func @transform_0(%arg0: i32, %arg1: i32) -> (i32, i32, i32) {
    %c0_i32 = arith.constant 0 : i32
    %c0_i32_0 = arith.constant 0 : i32
    return %arg0, %arg1, %c0_i32 : i32, i32, i32
  }
  func.func @transform_1(%arg0: i32, %arg1: i32) -> (i32, i32, i32) {
    %c0_i32 = arith.constant 0 : i32
    %c0_i32_0 = arith.constant 0 : i32
    return %arg0, %c0_i32, %arg1 : i32, i32, i32
  }
  func.func @transform_2(%arg0: i32, %arg1: i32) -> (i32, i32, i32) {
    %c0_i32 = arith.constant 0 : i32
    %c0_i32_0 = arith.constant 0 : i32
    return %arg0, %c0_i32, %arg1 : i32, i32, i32
  }
}

</mosaic_0001>

<llo_original>
// kernel: tpu_custom_call.1
$region0: #{tpu_custom_call.1}
  #allocation0 [shape = 'u32[]', space=smem, size = 0x4, offset = 0x4, fixed_abs, tag = 'smem constant byte address 0x4 - core index']
  #allocation1 [shape = 'u32[144,128]{1,0:T(1,128)}', space=vmem, size = 0x12000, scoped, tag = 'internal scratch']
  %s0 = inlined_call_operand.vmem [shape: f32[2,256,8], index: 0, kind: input, shape index: {}]
  %s1 = inlined_call_operand.hbm [shape: f32[2,1,256], index: 1, kind: output, shape index: {0}]
  %s2 = inlined_call_operand.hbm [shape: f32[2,1,256], index: 2, kind: output, shape index: {1}]
  %3 = xla_tuple %s1, %s2
  %s4 = sld [smem:[#allocation0]]
  $region45: #{tpu_custom_call.1} parent=0
    _
  %s6 = ssub.s32 1, %s4
  %s7 = scalar_select 0, %s6, %s4
  $region1: #{tpu_custom_call.1} parent=0
    #allocation2 [shape = 'u8[1024]{0}', space=vmem, size = 0x400, scoped, tag = 'output window, operand 0']
    #allocation3 [shape = 's32[2]{0}', space=sflag, size = 0x8, scoped, tag = 'scoped memory for tpu_custom_call.1']
    #allocation4 [shape = 'u8[1024]{0}', space=vmem, size = 0x400, scoped, tag = 'output window, operand 1']
    #allocation5 [shape = 's32[2]{0}', space=sflag, size = 0x8, scoped, tag = 'scoped memory for tpu_custom_call.1']
    %8 = vsyncpa [#allocation3], 0
    %s9 = scalar_lea.sflag [#allocation3], 1
    %10 = vsyncpa %s9, 0
    %11 = vsyncpa [#allocation5], 0
    %s12 = scalar_lea.sflag [#allocation5], 1
    %13 = vsyncpa %s12, 0
    loop: start=0, step=1, limit=6
    $region2: #{tpu_custom_call.1} parent=1 // loop_pre_header
      _
    $region3: #{tpu_custom_call.1} parent=1 // loop_header
      %s15 = sphi 0, %s19
      %p16 = scmp.ge.s32.totalorder %s15, 6
      %s22 = sphi 0, %s34
      %s23 = sphi 0, %s30
      %s24 = sphi 0, %s22
      %s25 = sphi 0, %s23
      %s26 = sphi 0, %s24
      %s27 = sphi 0, %s25
      %s39 = sphi 0, %s41
      %s42 = sphi 0, %s39
      %s43 = sphi 0, %s42
      %s59 = sphi 0, %s43
      %s67 = sphi 0, %s69
      %s70 = sphi 0, %s67
      %s71 = sphi 0, %s70
      %s87 = sphi 0, %s71
      %s95 = sphi 0, %s97
      %s98 = sphi 0, %s95
      %s99 = sphi 0, %s98
      %s115 = sphi 0, %s99
    $region4: #{tpu_custom_call.1} parent=1 // loop_header_branch
      %18 = sbr.rel (%p16) target = $region8
    $region5: #{tpu_custom_call.1} parent=1 // loop_body
      %s20 = ssub.s32 %s15, 1
      %s21 = ssub.s32 %s15, 2
      %s28 = sadd.s32 1, %s23
      %p29 = scmp.ge.s32.totalorder %s28, 2
      %s30 = scalar_select %p29, 0, %s28
      %s31 = sadd.s32 1, %s22
      %s32 = scalar_select %p29, %s31, %s22
      %p33 = scmp.ge.s32.totalorder %s32, 2
      %s34 = scalar_select %p33, 0, %s32
      %s35 = ssub.s32 %s22, %s34
      %s36 = ssub.s32 %s23, %s30
      %s37 = sor.u32 %s35, %s36
      %p38 = scmp.eq.s32.totalorder %s37, 0
      %s40 = sadd.s32 %s39, 1
      %s41 = scalar_select %p38, %s39, %s40
      %p44 = pneg %p38
      %p45 = scmp.eq.s32.totalorder %s15, 3
      %p46 = por %p44, %p45
      %p47 = scmp.ne.s32.totalorder %s39, %s42
      %p48 = scmp.eq.s32.totalorder %s15, 0
      %p49 = por %p47, %p48
      %p50 = scmp.ne.s32.totalorder %s39, %s42
      %p51 = scmp.eq.s32.totalorder %s20, 3
      %p52 = por %p50, %p51
      %p53 = scmp.ne.s32.totalorder %s42, %s43
      %p54 = scmp.eq.s32.totalorder %s20, 0
      %p55 = por %p53, %p54
      %p56 = scmp.ne.s32.totalorder %s42, %s43
      %p57 = scmp.eq.s32.totalorder %s21, 3
      %p58 = por %p56, %p57
      %p60 = scmp.ne.s32.totalorder %s43, %s59
      %p61 = scmp.eq.s32.totalorder %s21, 0
      %p62 = por %p60, %p61
      %s63 = ssub.s32 %s22, %s34
      %s64 = ssub.s32 %s23, %s30
      %s65 = sor.u32 %s63, %s64
      %p66 = scmp.eq.s32.totalorder %s65, 0
      %s68 = sadd.s32 %s67, 1
      %s69 = scalar_select %p66, %s67, %s68
      %p72 = pneg %p66
      %p73 = scmp.eq.s32.totalorder %s15, 3
      %p74 = por %p72, %p73
      %p75 = scmp.ne.s32.totalorder %s67, %s70
      %p76 = scmp.eq.s32.totalorder %s15, 0
      %p77 = por %p75, %p76
      %p78 = scmp.ne.s32.totalorder %s67, %s70
      %p79 = scmp.eq.s32.totalorder %s20, 3
      %p80 = por %p78, %p79
      %p81 = scmp.ne.s32.totalorder %s70, %s71
      %p82 = scmp.eq.s32.totalorder %s20, 0
      %p83 = por %p81, %p82
      %p84 = scmp.ne.s32.totalorder %s70, %s71
      %p85 = scmp.eq.s32.totalorder %s21, 3
      %p86 = por %p84, %p85
      %p88 = scmp.ne.s32.totalorder %s71, %s87
      %p89 = scmp.eq.s32.totalorder %s21, 0
      %p90 = por %p88, %p89
      %s91 = ssub.s32 %s22, %s34
      %s92 = ssub.s32 %s23, %s30
      %s93 = sor.u32 %s91, %s92
      %p94 = scmp.eq.s32.totalorder %s93, 0
      %s96 = sadd.s32 %s95, 1
      %s97 = scalar_select %p94, %s95, %s96
      %p100 = pneg %p94
      %p101 = scmp.eq.s32.totalorder %s15, 3
      %p102 = por %p100, %p101
      %p103 = scmp.ne.s32.totalorder %s95, %s98
      %p104 = scmp.eq.s32.totalorder %s15, 0
      %p105 = por %p103, %p104
      %p106 = scmp.ne.s32.totalorder %s95, %s98
      %p107 = scmp.eq.s32.totalorder %s20, 3
      %p108 = por %p106, %p107
      %p109 = scmp.ne.s32.totalorder %s98, %s99
      %p110 = scmp.eq.s32.totalorder %s20, 0
      %p111 = por %p109, %p110
      %p112 = scmp.ne.s32.totalorder %s98, %s99
      %p113 = scmp.eq.s32.totalorder %s21, 3
      %p114 = por %p112, %p113
      %p116 = scmp.ne.s32.totalorder %s99, %s115
      %p117 = scmp.eq.s32.totalorder %s21, 0
      %p118 = por %p116, %p117
      %p119 = scmp.le.s32.totalorder 1, %s15
      %p120 = scmp.lt.s32.totalorder %s15, 5
      %p121 = pnand %p119, %p120
      %p122 = pneg %p121
      // Predicated region
      $region9: #{tpu_custom_call.1} parent=5 // pred_check
        _
      $region10: #{tpu_custom_call.1} parent=5 // pred_check_branch
        %124 = sbr.rel (%p121) target = $region12
      $region11: #{tpu_custom_call.1} parent=5 // pred_region
        %s125 = ssub.s32 %s15, 1
      $region12: #{tpu_custom_call.1} parent=5 // pred_fallthru
        _
      %p126 = scmp.lt.s32.totalorder %s15, 4
      // Predicated region
      $region13: #{tpu_custom_call.1} parent=5 // pred_check
        %p127 = pneg %p126
      $region14: #{tpu_custom_call.1} parent=5 // pred_check_branch
        %129 = sbr.rel (%p127) target = $region16
      $region15: #{tpu_custom_call.1} parent=5 // pred_region
        // Predicated region
        $region17: #{tpu_custom_call.1} parent=15 // pred_check
          %p130 = pneg %p49
        $region18: #{tpu_custom_call.1} parent=15 // pred_check_branch
          %132 = sbr.rel (%p130) target = $region20
        $region19: #{tpu_custom_call.1} parent=15 // pred_region
          %s133 = smul.u32 16, %s23
          %p134 = scmp.lt.s32.totalorder %s22, 1
          %s135 = scalar_select %p134, %s22, 1
          %p136 = scmp.lt.s32.totalorder %s133, 31
          %s137 = scalar_select %p136, %s133, 31
          %s138 = smul.addr %s135, 32
          %s139 = sadd.s32 %s137, %s138
          %s140 = smul.addr %s139, 8
          %s141 = scalar_lea.vmem %s0, %s140
          %s142 = smul.u32 16, %s23
        $region20: #{tpu_custom_call.1} parent=15 // pred_fallthru
          _
      $region16: #{tpu_custom_call.1} parent=5 // pred_fallthru
        _
      %p143 = scmp.le.s32.totalorder 1, %s15
      %p144 = scmp.lt.s32.totalorder %s15, 5
      %p145 = pnand %p143, %p144
      %p146 = pneg %p145
      // Predicated region
      $region21: #{tpu_custom_call.1} parent=5 // pred_check
        _
      $region22: #{tpu_custom_call.1} parent=5 // pred_check_branch
        %148 = sbr.rel (%p145) target = $region24
      $region23: #{tpu_custom_call.1} parent=5 // pred_region
        %s149 = ssub.s32 %s15, 1
        %s150 = smul.u32 16, %s25
        %p151 = scmp.lt.s32.totalorder %s24, 1
        %s152 = scalar_select %p151, %s24, 1
        %p153 = scmp.lt.s32.totalorder %s150, 31
        %s154 = scalar_select %p153, %s150, 31
        %s155 = smul.addr %s152, 32
        %s156 = sadd.s32 %s154, %s155
        %s157 = smul.addr %s156, 8
        %s158 = scalar_lea.vmem %s0, %s157
        %p159 = pneg %p55
        %p160 = pneg %p52
        %p161 = pneg %p83
        %p162 = pneg %p80
        %s163 = sand.u32 %s70, 1
        %s164 = scalar_lea.sflag [#allocation3], %s163
        %s165 = sand.u32 %s70, 1
        %s166 = scalar_lea.vmem [#allocation2], %s165
        %p167 = pneg %p111
        %p168 = pneg %p108
        %s169 = sand.u32 %s98, 1
        %s170 = scalar_lea.sflag [#allocation5], %s169
        %s171 = sand.u32 %s98, 1
        %s172 = scalar_lea.vmem [#allocation4], %s171
        %s173 = smul.u32 16, %s25
        %p174 = scmp.lt.s32.totalorder %s24, 1
        %s175 = scalar_select %p174, %s24, 1
        %p176 = scmp.lt.s32.totalorder %s173, 31
        %s177 = scalar_select %p176, %s173, 31
        %s178 = smul.addr %s175, 32
        %s179 = sadd.s32 %s177, %s178
        %s180 = smul.addr %s179, 8
        %s181 = scalar_lea.vmem %s0, %s180
        %s182 = smul.u32 16, %s25
        %v183 = vld [vmem:[%s181] sm:$0xff]
        %v184 = vld [vmem:[%s181 + $0x8] sm:$0xff]
        %v185 = vld [vmem:[%s181 + $0x10] sm:$0xff]
        %v186 = vld [vmem:[%s181 + $0x18] sm:$0xff]
        %v187 = vld [vmem:[%s181 + $0x20] sm:$0xff]
        %v188 = vld [vmem:[%s181 + $0x28] sm:$0xff]
        %v189 = vld [vmem:[%s181 + $0x30] sm:$0xff]
        %v190 = vld [vmem:[%s181 + $0x38] sm:$0xff]
        %v191 = vld [vmem:[%s181 + $0x40] sm:$0xff]
        %v192 = vld [vmem:[%s181 + $0x48] sm:$0xff]
        %v193 = vld [vmem:[%s181 + $0x50] sm:$0xff]
        %v194 = vld [vmem:[%s181 + $0x58] sm:$0xff]
        %v195 = vld [vmem:[%s181 + $0x60] sm:$0xff]
        %v196 = vld [vmem:[%s181 + $0x68] sm:$0xff]
        %v197 = vld [vmem:[%s181 + $0x70] sm:$0xff]
        %v198 = vld [vmem:[%s181 + $0x78] sm:$0xff]
        %vm199 = vcmask 64512
        %v200 = vsel %vm199, %v183, -inf
        %201 = vmax.xlane.f32.xlu0 %v200
        %v202 = vpop.xlane.xlu0 %201
        %v203 = vsel %vm199, %v184, -inf
        %204 = vmax.xlane.f32.xlu0 %v203
        %v205 = vpop.xlane.xlu0 %204
        %v206 = vsel %vm199, %v185, -inf
        %207 = vmax.xlane.f32.xlu0 %v206
        %v208 = vpop.xlane.xlu0 %207
        %v209 = vsel %vm199, %v186, -inf
        %210 = vmax.xlane.f32.xlu0 %v209
        %v211 = vpop.xlane.xlu0 %210
        %v212 = vsel %vm199, %v187, -inf
        %213 = vmax.xlane.f32.xlu0 %v212
        %v214 = vpop.xlane.xlu0 %213
        %v215 = vsel %vm199, %v188, -inf
        %216 = vmax.xlane.f32.xlu0 %v215
        %v217 = vpop.xlane.xlu0 %216
        %v218 = vsel %vm199, %v189, -inf
        %219 = vmax.xlane.f32.xlu0 %v218
        %v220 = vpop.xlane.xlu0 %219
        %v221 = vsel %vm199, %v190, -inf
        %222 = vmax.xlane.f32.xlu0 %v221
        %v223 = vpop.xlane.xlu0 %222
        %v224 = vsel %vm199, %v191, -inf
        %225 = vmax.xlane.f32.xlu0 %v224
        %v226 = vpop.xlane.xlu0 %225
        %v227 = vsel %vm199, %v192, -inf
        %228 = vmax.xlane.f32.xlu0 %v227
        %v229 = vpop.xlane.xlu0 %228
        %v230 = vsel %vm199, %v193, -inf
        %231 = vmax.xlane.f32.xlu0 %v230
        %v232 = vpop.xlane.xlu0 %231
        %v233 = vsel %vm199, %v194, -inf
        %234 = vmax.xlane.f32.xlu0 %v233
        %v235 = vpop.xlane.xlu0 %234
        %v236 = vsel %vm199, %v195, -inf
        %237 = vmax.xlane.f32.xlu0 %v236
        %v238 = vpop.xlane.xlu0 %237
        %v239 = vsel %vm199, %v196, -inf
        %240 = vmax.xlane.f32.xlu0 %v239
        %v241 = vpop.xlane.xlu0 %240
        %v242 = vsel %vm199, %v197, -inf
        %243 = vmax.xlane.f32.xlu0 %v242
        %v244 = vpop.xlane.xlu0 %243
        %v245 = vsel %vm199, %v198, -inf
        %246 = vmax.xlane.f32.xlu0 %v245
        %v247 = vpop.xlane.xlu0 %246
        %v248 = vlaneseq
        %v249 = vand.u32 %v248, 127
        %vm250 = vcmp.eq.f32.partialorder %v183, %v202
        %vm251 = vcmp.eq.f32.partialorder %v184, %v205
        %vm252 = vcmp.eq.f32.partialorder %v185, %v208
        %vm253 = vcmp.eq.f32.partialorder %v186, %v211
        %vm254 = vcmp.eq.f32.partialorder %v187, %v214
        %vm255 = vcmp.eq.f32.partialorder %v188, %v217
        %vm256 = vcmp.eq.f32.partialorder %v189, %v220
        %vm257 = vcmp.eq.f32.partialorder %v190, %v223
        %vm258 = vcmp.eq.f32.partialorder %v191, %v226
        %vm259 = vcmp.eq.f32.partialorder %v192, %v229
        %vm260 = vcmp.eq.f32.partialorder %v193, %v232
        %vm261 = vcmp.eq.f32.partialorder %v194, %v235
        %vm262 = vcmp.eq.f32.partialorder %v195, %v238
        %vm263 = vcmp.eq.f32.partialorder %v196, %v241
        %vm264 = vcmp.eq.f32.partialorder %v197, %v244
        %vm265 = vcmp.eq.f32.partialorder %v198, %v247
        %v266 = vsel %vm250, %v249, 8
        %v267 = vsel %vm251, %v249, 8
        %v268 = vsel %vm252, %v249, 8
        %v269 = vsel %vm253, %v249, 8
        %v270 = vsel %vm254, %v249, 8
        %v271 = vsel %vm255, %v249, 8
        %v272 = vsel %vm256, %v249, 8
        %v273 = vsel %vm257, %v249, 8
        %v274 = vsel %vm258, %v249, 8
        %v275 = vsel %vm259, %v249, 8
        %v276 = vsel %vm260, %v249, 8
        %v277 = vsel %vm261, %v249, 8
        %v278 = vsel %vm262, %v249, 8
        %v279 = vsel %vm263, %v249, 8
        %v280 = vsel %vm264, %v249, 8
        %v281 = vsel %vm265, %v249, 8
        %v282 = vsel %vm199, %v266, 2147483647
        %v283 = vand.u32 %v282, 65535
        %v284 = vshra.s32 %v282, 16
        %v285 = vcvt.s32.f32 %v283
        %v286 = vcvt.s32.f32 %v284
        %287 = vmin.xlane.f32.xlu0 %v286
        %v288 = vpop.xlane.xlu0 %287
        %vm289 = vcmp.eq.f32.partialorder %v286, %v288
        %v290 = vsel %vm289, %v285, inf
        %291 = vmin.xlane.f32.xlu0 %v290
        %v292 = vpop.xlane.xlu0 %291
        %v293 = vcvt.f32.s32 %v292
        %v294 = vcvt.f32.s32 %v288
        %v295 = vshll.u32 %v294, 16
        %v296 = vadd.s32 %v295, %v293
        %v297 = vsel %vm199, %v267, 2147483647
        %v298 = vand.u32 %v297, 65535
        %v299 = vshra.s32 %v297, 16
        %v300 = vcvt.s32.f32 %v298
        %v301 = vcvt.s32.f32 %v299
        %302 = vmin.xlane.f32.xlu0 %v301
        %v303 = vpop.xlane.xlu0 %302
        %vm304 = vcmp.eq.f32.partialorder %v301, %v303
        %v305 = vsel %vm304, %v300, inf
        %306 = vmin.xlane.f32.xlu0 %v305
        %v307 = vpop.xlane.xlu0 %306
        %v308 = vcvt.f32.s32 %v307
        %v309 = vcvt.f32.s32 %v303
        %v310 = vshll.u32 %v309, 16
        %v311 = vadd.s32 %v310, %v308
        %v312 = vsel %vm199, %v268, 2147483647
        %v313 = vand.u32 %v312, 65535
        %v314 = vshra.s32 %v312, 16
        %v315 = vcvt.s32.f32 %v313
        %v316 = vcvt.s32.f32 %v314
        %317 = vmin.xlane.f32.xlu0 %v316
        %v318 = vpop.xlane.xlu0 %317
        %vm319 = vcmp.eq.f32.partialorder %v316, %v318
        %v320 = vsel %vm319, %v315, inf
        %321 = vmin.xlane.f32.xlu0 %v320
        %v322 = vpop.xlane.xlu0 %321
        %v323 = vcvt.f32.s32 %v322
        %v324 = vcvt.f32.s32 %v318
        %v325 = vshll.u32 %v324, 16
        %v326 = vadd.s32 %v325, %v323
        %v327 = vsel %vm199, %v269, 2147483647
        %v328 = vand.u32 %v327, 65535
        %v329 = vshra.s32 %v327, 16
        %v330 = vcvt.s32.f32 %v328
        %v331 = vcvt.s32.f32 %v329
        %332 = vmin.xlane.f32.xlu0 %v331
        %v333 = vpop.xlane.xlu0 %332
        %vm334 = vcmp.eq.f32.partialorder %v331, %v333
        %v335 = vsel %vm334, %v330, inf
        %336 = vmin.xlane.f32.xlu0 %v335
        %v337 = vpop.xlane.xlu0 %336
        %v338 = vcvt.f32.s32 %v337
        %v339 = vcvt.f32.s32 %v333
        %v340 = vshll.u32 %v339, 16
        %v341 = vadd.s32 %v340, %v338
        %v342 = vsel %vm199, %v270, 2147483647
        %v343 = vand.u32 %v342, 65535
        %v344 = vshra.s32 %v342, 16
        %v345 = vcvt.s32.f32 %v343
        %v346 = vcvt.s32.f32 %v344
        %347 = vmin.xlane.f32.xlu0 %v346
        %v348 = vpop.xlane.xlu0 %347
        %vm349 = vcmp.eq.f32.partialorder %v346, %v348
        %v350 = vsel %vm349, %v345, inf
        %351 = vmin.xlane.f32.xlu0 %v350
        %v352 = vpop.xlane.xlu0 %351
        %v353 = vcvt.f32.s32 %v352
        %v354 = vcvt.f32.s32 %v348
        %v355 = vshll.u32 %v354, 16
        %v356 = vadd.s32 %v355, %v353
        %v357 = vsel %vm199, %v271, 2147483647
        %v358 = vand.u32 %v357, 65535
        %v359 = vshra.s32 %v357, 16
        %v360 = vcvt.s32.f32 %v358
        %v361 = vcvt.s32.f32 %v359
        %362 = vmin.xlane.f32.xlu0 %v361
        %v363 = vpop.xlane.xlu0 %362
        %vm364 = vcmp.eq.f32.partialorder %v361, %v363
        %v365 = vsel %vm364, %v360, inf
        %366 = vmin.xlane.f32.xlu0 %v365
        %v367 = vpop.xlane.xlu0 %366
        %v368 = vcvt.f32.s32 %v367
        %v369 = vcvt.f32.s32 %v363
        %v370 = vshll.u32 %v369, 16
        %v371 = vadd.s32 %v370, %v368
        %v372 = vsel %vm199, %v272, 2147483647
        %v373 = vand.u32 %v372, 65535
        %v374 = vshra.s32 %v372, 16
        %v375 = vcvt.s32.f32 %v373
        %v376 = vcvt.s32.f32 %v374
        %377 = vmin.xlane.f32.xlu0 %v376
        %v378 = vpop.xlane.xlu0 %377
        %vm379 = vcmp.eq.f32.partialorder %v376, %v378
        %v380 = vsel %vm379, %v375, inf
        %381 = vmin.xlane.f32.xlu0 %v380
        %v382 = vpop.xlane.xlu0 %381
        %v383 = vcvt.f32.s32 %v382
        %v384 = vcvt.f32.s32 %v378
        %v385 = vshll.u32 %v384, 16
        %v386 = vadd.s32 %v385, %v383
        %v387 = vsel %vm199, %v273, 2147483647
        %v388 = vand.u32 %v387, 65535
        %v389 = vshra.s32 %v387, 16
        %v390 = vcvt.s32.f32 %v388
        %v391 = vcvt.s32.f32 %v389
        %392 = vmin.xlane.f32.xlu0 %v391
        %v393 = vpop.xlane.xlu0 %392
        %vm394 = vcmp.eq.f32.partialorder %v391, %v393
        %v395 = vsel %vm394, %v390, inf
        %396 = vmin.xlane.f32.xlu0 %v395
        %v397 = vpop.xlane.xlu0 %396
        %v398 = vcvt.f32.s32 %v397
        %v399 = vcvt.f32.s32 %v393
        %v400 = vshll.u32 %v399, 16
        %v401 = vadd.s32 %v400, %v398
        %v402 = vsel %vm199, %v274, 2147483647
        %v403 = vand.u32 %v402, 65535
        %v404 = vshra.s32 %v402, 16
        %v405 = vcvt.s32.f32 %v403
        %v406 = vcvt.s32.f32 %v404
        %407 = vmin.xlane.f32.xlu0 %v406
        %v408 = vpop.xlane.xlu0 %407
        %vm409 = vcmp.eq.f32.partialorder %v406, %v408
        %v410 = vsel %vm409, %v405, inf
        %411 = vmin.xlane.f32.xlu0 %v410
        %v412 = vpop.xlane.xlu0 %411
        %v413 = vcvt.f32.s32 %v412
        %v414 = vcvt.f32.s32 %v408
        %v415 = vshll.u32 %v414, 16
        %v416 = vadd.s32 %v415, %v413
        %v417 = vsel %vm199, %v275, 2147483647
        %v418 = vand.u32 %v417, 65535
        %v419 = vshra.s32 %v417, 16
        %v420 = vcvt.s32.f32 %v418
        %v421 = vcvt.s32.f32 %v419
        %422 = vmin.xlane.f32.xlu0 %v421
        %v423 = vpop.xlane.xlu0 %422
        %vm424 = vcmp.eq.f32.partialorder %v421, %v423
        %v425 = vsel %vm424, %v420, inf
        %426 = vmin.xlane.f32.xlu0 %v425
        %v427 = vpop.xlane.xlu0 %426
        %v428 = vcvt.f32.s32 %v427
        %v429 = vcvt.f32.s32 %v423
        %v430 = vshll.u32 %v429, 16
        %v431 = vadd.s32 %v430, %v428
        %v432 = vsel %vm199, %v276, 2147483647
        %v433 = vand.u32 %v432, 65535
        %v434 = vshra.s32 %v432, 16
        %v435 = vcvt.s32.f32 %v433
        %v436 = vcvt.s32.f32 %v434
        %437 = vmin.xlane.f32.xlu0 %v436
        %v438 = vpop.xlane.xlu0 %437
        %vm439 = vcmp.eq.f32.partialorder %v436, %v438
        %v440 = vsel %vm439, %v435, inf
        %441 = vmin.xlane.f32.xlu0 %v440
        %v442 = vpop.xlane.xlu0 %441
        %v443 = vcvt.f32.s32 %v442
        %v444 = vcvt.f32.s32 %v438
        %v445 = vshll.u32 %v444, 16
        %v446 = vadd.s32 %v445, %v443
        %v447 = vsel %vm199, %v277, 2147483647
        %v448 = vand.u32 %v447, 65535
        %v449 = vshra.s32 %v447, 16
        %v450 = vcvt.s32.f32 %v448
        %v451 = vcvt.s32.f32 %v449
        %452 = vmin.xlane.f32.xlu0 %v451
        %v453 = vpop.xlane.xlu0 %452
        %vm454 = vcmp.eq.f32.partialorder %v451, %v453
        %v455 = vsel %vm454, %v450, inf
        %456 = vmin.xlane.f32.xlu0 %v455
        %v457 = vpop.xlane.xlu0 %456
        %v458 = vcvt.f32.s32 %v457
        %v459 = vcvt.f32.s32 %v453
        %v460 = vshll.u32 %v459, 16
        %v461 = vadd.s32 %v460, %v458
        %v462 = vsel %vm199, %v278, 2147483647
        %v463 = vand.u32 %v462, 65535
        %v464 = vshra.s32 %v462, 16
        %v465 = vcvt.s32.f32 %v463
        %v466 = vcvt.s32.f32 %v464
        %467 = vmin.xlane.f32.xlu0 %v466
        %v468 = vpop.xlane.xlu0 %467
        %vm469 = vcmp.eq.f32.partialorder %v466, %v468
        %v470 = vsel %vm469, %v465, inf
        %471 = vmin.xlane.f32.xlu0 %v470
        %v472 = vpop.xlane.xlu0 %471
        %v473 = vcvt.f32.s32 %v472
        %v474 = vcvt.f32.s32 %v468
        %v475 = vshll.u32 %v474, 16
        %v476 = vadd.s32 %v475, %v473
        %v477 = vsel %vm199, %v279, 2147483647
        %v478 = vand.u32 %v477, 65535
        %v479 = vshra.s32 %v477, 16
        %v480 = vcvt.s32.f32 %v478
        %v481 = vcvt.s32.f32 %v479
        %482 = vmin.xlane.f32.xlu0 %v481
        %v483 = vpop.xlane.xlu0 %482
        %vm484 = vcmp.eq.f32.partialorder %v481, %v483
        %v485 = vsel %vm484, %v480, inf
        %486 = vmin.xlane.f32.xlu0 %v485
        %v487 = vpop.xlane.xlu0 %486
        %v488 = vcvt.f32.s32 %v487
        %v489 = vcvt.f32.s32 %v483
        %v490 = vshll.u32 %v489, 16
        %v491 = vadd.s32 %v490, %v488
        %v492 = vsel %vm199, %v280, 2147483647
        %v493 = vand.u32 %v492, 65535
        %v494 = vshra.s32 %v492, 16
        %v495 = vcvt.s32.f32 %v493
        %v496 = vcvt.s32.f32 %v494
        %497 = vmin.xlane.f32.xlu0 %v496
        %v498 = vpop.xlane.xlu0 %497
        %vm499 = vcmp.eq.f32.partialorder %v496, %v498
        %v500 = vsel %vm499, %v495, inf
        %501 = vmin.xlane.f32.xlu0 %v500
        %v502 = vpop.xlane.xlu0 %501
        %v503 = vcvt.f32.s32 %v502
        %v504 = vcvt.f32.s32 %v498
        %v505 = vshll.u32 %v504, 16
        %v506 = vadd.s32 %v505, %v503
        %v507 = vsel %vm199, %v281, 2147483647
        %v508 = vand.u32 %v507, 65535
        %v509 = vshra.s32 %v507, 16
        %v510 = vcvt.s32.f32 %v508
        %v511 = vcvt.s32.f32 %v509
        %512 = vmin.xlane.f32.xlu0 %v511
        %v513 = vpop.xlane.xlu0 %512
        %vm514 = vcmp.eq.f32.partialorder %v511, %v513
        %v515 = vsel %vm514, %v510, inf
        %516 = vmin.xlane.f32.xlu0 %v515
        %v517 = vpop.xlane.xlu0 %516
        %v518 = vcvt.f32.s32 %v517
        %v519 = vcvt.f32.s32 %v513
        %v520 = vshll.u32 %v519, 16
        %v521 = vadd.s32 %v520, %v518
        %vm522 = vcmp.lt.s32.totalorder %v296, 7
        %v523 = vsel %vm522, %v296, 7
        %vm524 = vcmp.lt.s32.totalorder %v311, 7
        %v525 = vsel %vm524, %v311, 7
        %vm526 = vcmp.lt.s32.totalorder %v326, 7
        %v527 = vsel %vm526, %v326, 7
        %vm528 = vcmp.lt.s32.totalorder %v341, 7
        %v529 = vsel %vm528, %v341, 7
        %vm530 = vcmp.lt.s32.totalorder %v356, 7
        %v531 = vsel %vm530, %v356, 7
        %vm532 = vcmp.lt.s32.totalorder %v371, 7
        %v533 = vsel %vm532, %v371, 7
        %vm534 = vcmp.lt.s32.totalorder %v386, 7
        %v535 = vsel %vm534, %v386, 7
        %vm536 = vcmp.lt.s32.totalorder %v401, 7
        %v537 = vsel %vm536, %v401, 7
        %vm538 = vcmp.lt.s32.totalorder %v416, 7
        %v539 = vsel %vm538, %v416, 7
        %vm540 = vcmp.lt.s32.totalorder %v431, 7
        %v541 = vsel %vm540, %v431, 7
        %vm542 = vcmp.lt.s32.totalorder %v446, 7
        %v543 = vsel %vm542, %v446, 7
        %vm544 = vcmp.lt.s32.totalorder %v461, 7
        %v545 = vsel %vm544, %v461, 7
        %vm546 = vcmp.lt.s32.totalorder %v476, 7
        %v547 = vsel %vm546, %v476, 7
        %vm548 = vcmp.lt.s32.totalorder %v491, 7
        %v549 = vsel %vm548, %v491, 7
        %vm550 = vcmp.lt.s32.totalorder %v506, 7
        %v551 = vsel %vm550, %v506, 7
        %vm552 = vcmp.lt.s32.totalorder %v521, 7
        %v553 = vsel %vm552, %v521, 7
        %554 = vxpose.xlu0.b32.start [1/16] %v202, 128
        %555 = vxpose.xlu0.b32.cont [2/16] %v205, 128
        %556 = vxpose.xlu0.b32.cont [3/16] %v208, 128
        %557 = vxpose.xlu0.b32.cont [4/16] %v211, 128
        %558 = vxpose.xlu0.b32.cont [5/16] %v214, 128
        %559 = vxpose.xlu0.b32.cont [6/16] %v217, 128
        %560 = vxpose.xlu0.b32.cont [7/16] %v220, 128
        %561 = vxpose.xlu0.b32.cont [8/16] %v223, 128
        %562 = vxpose.xlu0.b32.cont [9/16] %v226, 128
        %563 = vxpose.xlu0.b32.cont [10/16] %v229, 128
        %564 = vxpose.xlu0.b32.cont [11/16] %v232, 128
        %565 = vxpose.xlu0.b32.cont [12/16] %v235, 128
        %566 = vxpose.xlu0.b32.cont [13/16] %v238, 128
        %567 = vxpose.xlu0.b32.cont [14/16] %v241, 128
        %568 = vxpose.xlu0.b32.cont [15/16] %v244, 128
        %569 = vxpose.xlu0.b32.end [16/16] %v247, 128
        %v570 = vpop.trf.xlu0
        %v571 = vpop.trf.xlu0
        %v572 = vpop.trf.xlu0
        %v573 = vpop.trf.xlu0
        %v574 = vpop.trf.xlu0
        %v575 = vpop.trf.xlu0
        %v576 = vpop.trf.xlu0
        %v577 = vpop.trf.xlu0
        %v578 = vpop.trf.xlu0
        %v579 = vpop.trf.xlu0
        %v580 = vpop.trf.xlu0
        %v581 = vpop.trf.xlu0
        %v582 = vpop.trf.xlu0
        %v583 = vpop.trf.xlu0
        %v584 = vpop.trf.xlu0
        %v585 = vpop.trf.xlu0
        %586 = vst [vmem:[%s166] sm:$0x1] %v570
        %587 = vxpose.xlu0.b32.start [1/16] %v523, 128
        %588 = vxpose.xlu0.b32.cont [2/16] %v525, 128
        %589 = vxpose.xlu0.b32.cont [3/16] %v527, 128
        %590 = vxpose.xlu0.b32.cont [4/16] %v529, 128
        %591 = vxpose.xlu0.b32.cont [5/16] %v531, 128
        %592 = vxpose.xlu0.b32.cont [6/16] %v533, 128
        %593 = vxpose.xlu0.b32.cont [7/16] %v535, 128
        %594 = vxpose.xlu0.b32.cont [8/16] %v537, 128
        %595 = vxpose.xlu0.b32.cont [9/16] %v539, 128
        %596 = vxpose.xlu0.b32.cont [10/16] %v541, 128
        %597 = vxpose.xlu0.b32.cont [11/16] %v543, 128
        %598 = vxpose.xlu0.b32.cont [12/16] %v545, 128
        %599 = vxpose.xlu0.b32.cont [13/16] %v547, 128
        %600 = vxpose.xlu0.b32.cont [14/16] %v549, 128
        %601 = vxpose.xlu0.b32.cont [15/16] %v551, 128
        %602 = vxpose.xlu0.b32.end [16/16] %v553, 128
        %v603 = vpop.trf.xlu0
        %v604 = vpop.trf.xlu0
        %v605 = vpop.trf.xlu0
        %v606 = vpop.trf.xlu0
        %v607 = vpop.trf.xlu0
        %v608 = vpop.trf.xlu0
        %v609 = vpop.trf.xlu0
        %v610 = vpop.trf.xlu0
        %v611 = vpop.trf.xlu0
        %v612 = vpop.trf.xlu0
        %v613 = vpop.trf.xlu0
        %v614 = vpop.trf.xlu0
        %v615 = vpop.trf.xlu0
        %v616 = vpop.trf.xlu0
        %v617 = vpop.trf.xlu0
        %v618 = vpop.trf.xlu0
        %v619 = vcvt.s32.f32 %v603
        %620 = vst [vmem:[%s172] sm:$0x1] %v619
        %s621 = sand.u32 %s70, 1
        %s622 = scalar_lea.sflag [#allocation3], %s621
        %s623 = sand.u32 %s70, 1
        %s624 = scalar_lea.vmem [#allocation2], %s623
        %s625 = sand.u32 %s98, 1
        %s626 = scalar_lea.sflag [#allocation5], %s625
        %s627 = sand.u32 %s98, 1
        %s628 = scalar_lea.vmem [#allocation4], %s627
        // Predicated region
        $region25: #{tpu_custom_call.1} parent=23 // pred_check
          %p629 = pneg %p80
        $region26: #{tpu_custom_call.1} parent=23 // pred_check_branch
          %631 = sbr.rel (%p629) target = $region28
        $region27: #{tpu_custom_call.1} parent=23 // pred_region
          %s633 = ssub.s32 16, 16
          %634 = vsyncadd %s622, %s633
          %s635 = smul.addr %s24, 2
          %s636 = sadd.s32 %s25, %s635
          %s637 = smul.addr %s636, 16
          %s638 = scalar_lea.hbm %s1, %s637
          %s640 = sshll.u32 %s624, 4
          %s641 = int_to_ptr.vmem [resolvable:$true] %s640
          %643 = dma.vmem_to_hbm [thread:$0]  %s641, 16, %s638, %s622
        $region28: #{tpu_custom_call.1} parent=23 // pred_fallthru
          _
        // Predicated region
        $region29: #{tpu_custom_call.1} parent=23 // pred_check
          %p644 = pneg %p108
        $region30: #{tpu_custom_call.1} parent=23 // pred_check_branch
          %646 = sbr.rel (%p644) target = $region32
        $region31: #{tpu_custom_call.1} parent=23 // pred_region
          %s648 = ssub.s32 16, 16
          %649 = vsyncadd %s626, %s648
          %s650 = smul.addr %s24, 2
          %s651 = sadd.s32 %s25, %s650
          %s652 = smul.addr %s651, 16
          %s653 = scalar_lea.hbm %s2, %s652
          %s655 = sshll.u32 %s628, 4
          %s656 = int_to_ptr.vmem [resolvable:$true] %s655
          %658 = dma.vmem_to_hbm [thread:$0]  %s656, 16, %s653, %s626
        $region32: #{tpu_custom_call.1} parent=23 // pred_fallthru
          _
      $region24: #{tpu_custom_call.1} parent=5 // pred_fallthru
        _
      %p659 = scmp.le.s32.totalorder 2, %s15
      // Predicated region
      $region33: #{tpu_custom_call.1} parent=5 // pred_check
        %p660 = pneg %p659
      $region34: #{tpu_custom_call.1} parent=5 // pred_check_branch
        %662 = sbr.rel (%p660) target = $region36
      $region35: #{tpu_custom_call.1} parent=5 // pred_region
        %s663 = ssub.s32 %s15, 2
        // Predicated region
        $region37: #{tpu_custom_call.1} parent=35 // pred_check
          %p664 = pneg %p86
        $region38: #{tpu_custom_call.1} parent=35 // pred_check_branch
          %666 = sbr.rel (%p664) target = $region40
        $region39: #{tpu_custom_call.1} parent=35 // pred_region
          %s667 = sand.u32 %s71, 1
          %s668 = scalar_lea.sflag [#allocation3], %s667
          %s669 = sand.u32 %s71, 1
          %s670 = scalar_lea.vmem [#allocation2], %s669
          %671 = dma.done %s668, 16
        $region40: #{tpu_custom_call.1} parent=35 // pred_fallthru
          _
        // Predicated region
        $region41: #{tpu_custom_call.1} parent=35 // pred_check
          %p672 = pneg %p114
        $region42: #{tpu_custom_call.1} parent=35 // pred_check_branch
          %674 = sbr.rel (%p672) target = $region44
        $region43: #{tpu_custom_call.1} parent=35 // pred_region
          %s675 = sand.u32 %s99, 1
          %s676 = scalar_lea.sflag [#allocation5], %s675
          %s677 = sand.u32 %s99, 1
          %s678 = scalar_lea.vmem [#allocation4], %s677
          %679 = dma.done %s676, 16
        $region44: #{tpu_custom_call.1} parent=35 // pred_fallthru
          _
      $region36: #{tpu_custom_call.1} parent=5 // pred_fallthru
        _
    $region6: #{tpu_custom_call.1} parent=1 // loop_footer
      %s19 = sadd.s32 1, %s15
    $region7: #{tpu_custom_call.1} parent=1 // loop_footer_branch
      %14 = sbr.rel target = $region3
    $region8: #{tpu_custom_call.1} parent=1 // loop_exit
      _
    %680 = vsyncpa [#allocation3], 1
    %s681 = scalar_lea.sflag [#allocation3], 1
    %682 = vsyncpa %s681, 1
    %683 = vsyncpa [#allocation5], 1
    %s684 = scalar_lea.sflag [#allocation5], 1
    %685 = vsyncpa %s684, 1

</llo_original>
